<compile_context>
chip_gen: v7x
topology: tpu7x:2x2x1
jax: 0.10.0
libtpu: 0.0.40
codegen_flags: <defaults>
</compile_context>

<pallas_src>
import functools

import jax
import jax.numpy as jnp
import numpy as np
from jax.experimental import pallas as pl
from jax.experimental.pallas import tpu as pltpu


def _decomp_kernel(x_ref, res_ref, mean_ref, *, kernel_size):
    """x_ref/res_ref/mean_ref: (L, NT) tiles — time on sublanes, channels on lanes."""
    k = kernel_size
    pad = (k - 1) // 2
    l_out = x_ref.shape[0]
    n_lanes = x_ref.shape[1]

    xf = x_ref[...].astype(jnp.float32)                       # single cast, reused

    # Replicate pad along time as a value (no VMEM scratch round-trip).
    if pad > 0:
        top = jnp.broadcast_to(xf[0:1, :], (pad, n_lanes))
        bot = jnp.broadcast_to(xf[l_out - 1:l_out, :], (pad, n_lanes))
        xpad = jnp.concatenate([top, xf, bot], axis=0)        # (L + 2*pad, NT)
    else:
        xpad = xf

    # Moving-window sum via binary doubling:
    #   S_w[t] = sum_{i<w} xpad[t+i];  S_{2w}[t] = S_w[t] + S_w[t+w].
    # O(log k) shifted adds instead of k loads/adds.
    sums = {1: xpad}
    s, w = xpad, 1
    while 2 * w <= k:
        s = s[: s.shape[0] - w, :] + s[w:, :]
        w *= 2
        sums[w] = s

    # Combine power-of-two windows (binary decomposition of k) into width-k sums.
    acc = None
    off = 0
    rem = k
    for w in sorted(sums.keys(), reverse=True):
        if rem >= w:
            part = sums[w][off:off + l_out, :]
            acc = part if acc is None else acc + part
            off += w
            rem -= w
    mean = acc * jnp.float32(1.0 / k)

    mean_ref[...] = mean.astype(mean_ref.dtype)
    # NOTE: res is derived from the f32 mean (not the dtype-rounded stored mean);
    # for sub-f32 dtypes res + mean may differ from x by one ulp.
    res_ref[...] = (xf - mean).astype(res_ref.dtype)


def _vmem_need_bytes(l_rows, lanes, kernel_size, itemsize):
    pad = (kernel_size - 1) // 2
    t_rows = l_rows + 2 * pad
    tile = l_rows * lanes
    io = 2 * 3 * tile * itemsize                  # 1 in + 2 out tiles, double-buffered
    vals = (3 * tile + 3 * t_rows * lanes) * 4    # xf/mean/res + xpad/doubling temps (f32)
    return io + vals + (2 << 20)                  # slack


def _vmem_capacity_bytes():
    try:
        return int(pltpu.get_tpu_info().vmem_capacity_bytes)
    except Exception:
        return 64 << 20                           # conservative default (v7x per-core VMEM)


def _choose_lane_tile(total_lanes, other_steps, l_rows, kernel_size, itemsize, budget):
    """Largest lane tile (multiple of 128 dividing total_lanes, or full extent) that fits
    the VMEM budget; prefer tilings giving >= 2 total grid steps (v7x megacore)."""
    if total_lanes % 128 == 0:
        cands = [t for t in range(128, total_lanes + 1, 128) if total_lanes % t == 0]
    else:
        cands = [total_lanes]
    fitting = [t for t in cands
               if _vmem_need_bytes(l_rows, t, kernel_size, itemsize) <= budget]
    if not fitting:
        fitting = [min(cands)]
    multi = [t for t in fitting if other_steps * (total_lanes // t) >= 2]
    pool = multi if multi else fitting
    return max(pool)


def series_decomp(x, kernel_size):
    """Pallas implementation of Autoformer's series_decomp.

    Args:
      x: (B, L, C) array.
      kernel_size: odd moving-average window (stride 1, replicate padding).

    Returns:
      (res, moving_mean), both (B, L, C).
    """
    assert kernel_size % 2 == 1, "series_decomp assumes an odd kernel_size"
    B, L, C = x.shape
    dtype = x.dtype
    itemsize = jnp.dtype(dtype).itemsize
    kernel = functools.partial(_decomp_kernel, kernel_size=kernel_size)

    vmem_cap = _vmem_capacity_bytes()
    budget = int(0.7 * vmem_cap)

    if C >= 128:
        # ---- Native (B, L, C) path: C already minor -> lanes; no HBM transposes. ----
        ct = _choose_lane_tile(C, B, L, kernel_size, itemsize, budget)
        grid = (B, C // ct)
        need = _vmem_need_bytes(L, ct, kernel_size, itemsize)
        vmem_limit = int(min(max(need, 16 << 20), int(0.9 * vmem_cap)))
        res, mean = pl.pallas_call(
            kernel,
            out_shape=(jax.ShapeDtypeStruct((B, L, C), dtype),
                       jax.ShapeDtypeStruct((B, L, C), dtype)),
            grid=grid,
            in_specs=[pl.BlockSpec((None, L, ct), lambda b, j: (b, 0, j))],
            out_specs=(pl.BlockSpec((None, L, ct), lambda b, j: (b, 0, j)),
                       pl.BlockSpec((None, L, ct), lambda b, j: (b, 0, j))),
            compiler_params=pltpu.CompilerParams(
                dimension_semantics=("parallel", "parallel"),
                vmem_limit_bytes=vmem_limit,
            ),
        )(x)
        return res, mean

    # ---- Lane-sparse fallback (C < 128): time-major (L, B*C), lanes padded to 128. ----
    N = B * C
    Np = ((N + 127) // 128) * 128
    xt = jnp.transpose(x, (1, 0, 2)).reshape(L, N)
    if Np != N:
        xt = jnp.pad(xt, ((0, 0), (0, Np - N)))
    nt = _choose_lane_tile(Np, 1, L, kernel_size, itemsize, budget)
    grid = (Np // nt,)
    need = _vmem_need_bytes(L, nt, kernel_size, itemsize)
    vmem_limit = int(min(max(need, 16 << 20), int(0.9 * vmem_cap)))
    res_t, mean_t = pl.pallas_call(
        kernel,
        out_shape=(jax.ShapeDtypeStruct((L, Np), dtype),
                   jax.ShapeDtypeStruct((L, Np), dtype)),
        grid=grid,
        in_specs=[pl.BlockSpec((L, nt), lambda j: (0, j))],
        out_specs=(pl.BlockSpec((L, nt), lambda j: (0, j)),
                   pl.BlockSpec((L, nt), lambda j: (0, j))),
        compiler_params=pltpu.CompilerParams(
            dimension_semantics=("parallel",),
            vmem_limit_bytes=vmem_limit,
        ),
    )(xt)
    res = res_t[:, :N].reshape(L, B, C).transpose(1, 0, 2)
    mean = mean_t[:, :N].reshape(L, B, C).transpose(1, 0, 2)
    return res, mean


def _reference(x, kernel_size):
    """Pure-JAX reference mirroring the PyTorch forward."""
    pad = (kernel_size - 1) // 2
    front = jnp.repeat(x[:, :1, :], pad, axis=1)
    end = jnp.repeat(x[:, -1:, :], pad, axis=1)
    xpad = jnp.concatenate([front, x, end], axis=1)
    L = x.shape[1]
    mean = jnp.mean(
        jnp.stack([xpad[:, i:i + L, :] for i in range(kernel_size)], axis=0),
        axis=0,
    )
    return x - mean, mean


if __name__ == "__main__":
    key = jax.random.PRNGKey(0)

    configs = [
        # (B, L, C, kernel_size)
        (2, 16, 8, 5),     # tiny sanity shape, lane-sparse fallback path
        (4, 32, 64, 25),   # realistic kernel_size, fallback with N=256 -> 2 lane tiles
        (2, 32, 128, 25),  # lane-dense native (B, L, C) path (no transposes), 2-step grid
    ]

    for (B, L, C, k) in configs:
        key, sub = jax.random.split(key)
        x = jax.random.normal(sub, (B, L, C), dtype=jnp.float32)

        fn = jax.jit(functools.partial(series_decomp, kernel_size=k))
        res, mean = fn(x)
        res = jax.block_until_ready(res)
        mean = jax.block_until_ready(mean)

        res_ref, mean_ref = _reference(x, k)
        assert res.shape == (B, L, C) and mean.shape == (B, L, C)
        np.testing.assert_allclose(np.asarray(mean), np.asarray(mean_ref),
                                   rtol=1e-5, atol=1e-5)
        np.testing.assert_allclose(np.asarray(res), np.asarray(res_ref),
                                   rtol=1e-5, atol=1e-5)

    print("KERNEL_OK")
</pallas_src>

<mosaic_0001>
module attributes {stable_mosaic.version = 11 : i64} {
  func.func @_decomp_kernel(%arg0: i32, %arg1: memref<16x128xf32, #tpu.memory_space<vmem>>, %arg2: memref<16x128xf32, #tpu.memory_space<vmem>>, %arg3: memref<16x128xf32, #tpu.memory_space<vmem>>) attributes {dimension_semantics = [#tpu.dimension_semantics<parallel>], iteration_bounds = array<i64: 1>, scalar_prefetch = 0 : i64, scratch_operands = 0 : i64, tpu.core_type = #tpu.core_type<tc>, window_params = [{transform_indices = @transform_0, window_bounds = array<i64: 16, 128>}, {transform_indices = @transform_1, window_bounds = array<i64: 16, 128>}, {transform_indices = @transform_2, window_bounds = array<i64: 16, 128>}]} {
    %c0 = arith.constant 0 : index
    %c0_0 = arith.constant 0 : index
    %0 = vector.load %arg1[%c0, %c0_0] : memref<16x128xf32, #tpu.memory_space<vmem>>, vector<16x128xf32>
    %1 = vector.extract_strided_slice %0 {offsets = [0, 0], sizes = [1, 128], strides = [1, 1]} : vector<16x128xf32> to vector<1x128xf32>
    %2 = vector.shape_cast %1 : vector<1x128xf32> to vector<1x128xf32>
    %3 = vector.broadcast %2 : vector<1x128xf32> to vector<2x128xf32>
    %4 = vector.extract_strided_slice %0 {offsets = [15, 0], sizes = [1, 128], strides = [1, 1]} : vector<16x128xf32> to vector<1x128xf32>
    %5 = vector.shape_cast %4 : vector<1x128xf32> to vector<1x128xf32>
    %6 = vector.broadcast %5 : vector<1x128xf32> to vector<2x128xf32>
    %7 = tpu.concatenate %3, %0, %6 in 0 : vector<2x128xf32>, vector<16x128xf32>, vector<2x128xf32> -> vector<20x128xf32>
    %8 = vector.extract_strided_slice %7 {offsets = [0, 0], sizes = [19, 128], strides = [1, 1]} : vector<20x128xf32> to vector<19x128xf32>
    %9 = vector.extract_strided_slice %7 {offsets = [1, 0], sizes = [19, 128], strides = [1, 1]} : vector<20x128xf32> to vector<19x128xf32>
    %10 = arith.addf %8, %9 : vector<19x128xf32>
    %11 = vector.extract_strided_slice %10 {offsets = [0, 0], sizes = [17, 128], strides = [1, 1]} : vector<19x128xf32> to vector<17x128xf32>
    %12 = vector.extract_strided_slice %10 {offsets = [2, 0], sizes = [17, 128], strides = [1, 1]} : vector<19x128xf32> to vector<17x128xf32>
    %13 = arith.addf %11, %12 : vector<17x128xf32>
    %14 = vector.extract_strided_slice %13 {offsets = [0, 0], sizes = [16, 128], strides = [1, 1]} : vector<17x128xf32> to vector<16x128xf32>
    %15 = vector.extract_strided_slice %7 {offsets = [4, 0], sizes = [16, 128], strides = [1, 1]} : vector<20x128xf32> to vector<16x128xf32>
    %16 = arith.addf %14, %15 : vector<16x128xf32>
    %cst = arith.constant 2.000000e-01 : f32
    %17 = vector.broadcast %cst : f32 to vector<16x128xf32>
    %18 = arith.mulf %16, %17 : vector<16x128xf32>
    %c0_1 = arith.constant 0 : index
    %c0_2 = arith.constant 0 : index
    %19 = vector.load %arg3[%c0_1, %c0_2] : memref<16x128xf32, #tpu.memory_space<vmem>>, vector<16x128xf32>
    tpu.vector_store %arg3[%c0_1, %c0_2], %18 {strides = array<i32>} : memref<16x128xf32, #tpu.memory_space<vmem>>, vector<16x128xf32>,
    %20 = arith.subf %0, %18 : vector<16x128xf32>
    %c0_3 = arith.constant 0 : index
    %c0_4 = arith.constant 0 : index
    %21 = vector.load %arg2[%c0_3, %c0_4] : memref<16x128xf32, #tpu.memory_space<vmem>>, vector<16x128xf32>
    tpu.vector_store %arg2[%c0_3, %c0_4], %20 {strides = array<i32>} : memref<16x128xf32, #tpu.memory_space<vmem>>, vector<16x128xf32>,
    return
  }
  func.func @transform_0(%arg0: i32) -> (i32, i32) {
    %c0_i32 = arith.constant 0 : i32
    %c0_i32_0 = arith.constant 0 : i32
    return %c0_i32, %arg0 : i32, i32
  }
  func.func @transform_1(%arg0: i32) -> (i32, i32) {
    %c0_i32 = arith.constant 0 : i32
    %c0_i32_0 = arith.constant 0 : i32
    return %c0_i32, %arg0 : i32, i32
  }
  func.func @transform_2(%arg0: i32) -> (i32, i32) {
    %c0_i32 = arith.constant 0 : i32
    %c0_i32_0 = arith.constant 0 : i32
    return %c0_i32, %arg0 : i32, i32
  }
}

</mosaic_0001>

<llo_original>
// kernel: series_decomp.1
$region0: #{series_decomp.1}
  #allocation0 [shape = 'u32[]', space=smem, size = 0x4, offset = 0x4, fixed_abs, tag = 'smem constant byte address 0x4 - core index']
  #allocation1 [shape = 'u32[144,128]{1,0:T(1,128)}', space=vmem, size = 0x12000, scoped, tag = 'internal scratch']
  %s0 = inlined_call_operand.vmem [shape: f32[16,128], index: 0, kind: input, shape index: {}]
  %s1 = inlined_call_operand.vmem [shape: f32[16,128], index: 1, kind: output, shape index: {0}]
  %s2 = inlined_call_operand.vmem [shape: f32[16,128], index: 2, kind: output, shape index: {1}]
  %3 = xla_tuple %s1, %s2
  %s4 = sld [smem:[#allocation0]]
  $region22: #{series_decomp.1} parent=0
    _
  %s6 = ssub.s32 1, %s4
  %s7 = scalar_select 0, %s6, %s4
  // Predicated region
  $region2: #{series_decomp.1} parent=0 // pred_check
    _
  $region3: #{series_decomp.1} parent=0 // pred_check_branch
    %9 = sbr.rel (0) target = $region5
  $region4: #{series_decomp.1} parent=0 // pred_region
    _
  $region5: #{series_decomp.1} parent=0 // pred_fallthru
    _
  %v10 = vld [vmem:[%s0] sm:$0xff]
  %v11 = vld [vmem:[%s0 + $0x8] sm:$0xff]
  %v12 = vlaneseq
  %v13 = vshrl.u32 %v12, 7
  %v14 = vsub.s32 0, %v13
  %v15 = vrot.slane %v10, %v14
  %v16 = vlaneseq
  %v17 = vshrl.u32 %v16, 7
  %v18 = vsub.s32 7, %v17
  %v19 = vrot.slane %v11, %v18
  %vm22 = vcmask 1041408
  %v23 = vrot.slane %v10, 6
  %v24 = vrot.slane %v11, 6
  %v25 = vsel %vm22, %v23, %v24
  %v29 = vsel %vm22, %v15, %v23
  %v30 = vsel %vm22, %v24, %v19
  %vm33 = vcmask 1046528
  %v34 = vrot.slane %v29, 1
  %v35 = vrot.slane %v25, 1
  %v36 = vsel %vm33, %v34, %v35
  %v37 = vrot.slane %v30, 1
  %v38 = vsel %vm33, %v35, %v37
  %v42 = vadd.f32 %v29, %v36
  %v43 = vadd.f32 %v25, %v38
  %v44 = vadd.f32 %v30, %v37
  %vm48 = vcmask 1045504
  %v49 = vrot.slane %v42, 2
  %v50 = vrot.slane %v43, 2
  %v51 = vsel %vm48, %v49, %v50
  %v52 = vrot.slane %v44, 2
  %v53 = vsel %vm48, %v50, %v52
  %v56 = vadd.f32 %v42, %v51
  %v57 = vadd.f32 %v43, %v53
  %vm58 = vcmask 1043456
  %v59 = vrot.slane %v29, 4
  %v60 = vrot.slane %v25, 4
  %v61 = vsel %vm58, %v59, %v60
  %v62 = vrot.slane %v30, 4
  %v63 = vsel %vm58, %v60, %v62
  %v66 = vadd.f32 %v56, %v61
  %v67 = vadd.f32 %v57, %v63
  %v68 = vmul.f32 %v66, 0.2
  %v69 = vmul.f32 %v67, 0.2
  %70 = vst [vmem:[%s2] sm:$0xff] %v68
  %71 = vst [vmem:[%s2 + $0x8] sm:$0xff] %v69
  %v72 = vsub.f32 %v10, %v68
  %v73 = vsub.f32 %v11, %v69
  %74 = vst [vmem:[%s1] sm:$0xff] %v72
  %75 = vst [vmem:[%s1 + $0x8] sm:$0xff] %v73
  // Predicated region
  $region6: #{series_decomp.1} parent=0 // pred_check
    _
  $region7: #{series_decomp.1} parent=0 // pred_check_branch
    %77 = sbr.rel (0) target = $region9
  $region8: #{series_decomp.1} parent=0 // pred_region
    _
  $region9: #{series_decomp.1} parent=0 // pred_fallthru
    _
  // Predicated region
  $region10: #{series_decomp.1} parent=0 // pred_check
    _
  $region11: #{series_decomp.1} parent=0 // pred_check_branch
    %79 = sbr.rel (0) target = $region13
  $region12: #{series_decomp.1} parent=0 // pred_region
    _
  $region13: #{series_decomp.1} parent=0 // pred_fallthru
    _
  // Predicated region
  $region14: #{series_decomp.1} parent=0 // pred_check
    _
  $region15: #{series_decomp.1} parent=0 // pred_check_branch
    %81 = sbr.rel (0) target = $region17
  $region16: #{series_decomp.1} parent=0 // pred_region
    _
  $region17: #{series_decomp.1} parent=0 // pred_fallthru
    _
  // Predicated region
  $region18: #{series_decomp.1} parent=0 // pred_check
    _
  $region19: #{series_decomp.1} parent=0 // pred_check_branch
    %83 = sbr.rel (0) target = $region21
  $region20: #{series_decomp.1} parent=0 // pred_region
    _
  $region21: #{series_decomp.1} parent=0 // pred_fallthru
    _

</llo_original>
